<compile_context>
chip_gen: v7x
topology: tpu7x:2x2x1
jax: 0.10.0
libtpu: 0.0.40
codegen_flags: <defaults>
</compile_context>

<pallas_src>
import jax
import jax.numpy as jnp
from jax.experimental import pallas as pl
from jax.experimental.pallas import tpu as pltpu

_LANES = 128


def _layer_merge_kernel(ab_ref, pre_ref, post_ref, out_ref):
    # ab_ref: SMEM (2,) f32 holding [alpha, 1 - alpha] (clip already applied).
    alpha = ab_ref[0].astype(out_ref.dtype)
    beta = ab_ref[1].astype(out_ref.dtype)
    out_ref[...] = pre_ref[...] * alpha + post_ref[...] * beta


def _min_sublanes(dtype):
    # f32 -> 8, bf16 -> 16, int8/fp8 -> 32 (dtype-aware sublane minimum).
    return max(8, 32 // jnp.dtype(dtype).itemsize)


def layer_merge(pre, post, layer_scale, *, target_block_bytes=2 << 20):
    """pre, post: arrays of identical shape (e.g. NCHW). layer_scale: scalar."""
    assert pre.shape == post.shape and pre.dtype == post.dtype
    orig_shape = pre.shape
    dtype = pre.dtype
    itemsize = jnp.dtype(dtype).itemsize
    n = pre.size

    # Lane-dense 2D view. Prefer a column count that divides n exactly so the
    # reshape is a free view (no extra HBM passes for pad / output slice).
    cols = None
    for c in (1024, 512, 256, _LANES):
        if n % c == 0:
            cols = c
            break

    flat_pre = pre.reshape(-1)
    flat_post = post.reshape(-1)
    padded = cols is None
    if padded:
        # Rare fallback: element count not a multiple of 128 -> pad + slice.
        cols = _LANES
        pad = (-n) % cols
        flat_pre = jnp.pad(flat_pre, (0, pad))
        flat_post = jnp.pad(flat_post, (0, pad))

    rows = flat_pre.size // cols
    pre2d = flat_pre.reshape(rows, cols)
    post2d = flat_post.reshape(rows, cols)

    # Block sizing: ~target_block_bytes per input block, rows tiled with a
    # cdiv grid (masked tail) instead of requiring divisibility.
    min_sub = _min_sublanes(dtype)
    tr = max(min_sub, target_block_bytes // (cols * itemsize))
    tr = min(tr, rows)
    if tr < rows:
        tr = max(min_sub, (tr // min_sub) * min_sub)
        grid = (pl.cdiv(rows, tr),)
    else:
        tr = rows  # single full-extent block (always a legal block shape)
        grid = (1,)

    # Hoist scalar work out of the kernel: alpha = clip(ls, 0, 1), beta = 1-alpha.
    alpha = jnp.clip(jnp.asarray(layer_scale, jnp.float32), 0.0, 1.0)
    ab = jnp.stack([alpha, 1.0 - alpha]).reshape(2)

    out2d = pl.pallas_call(
        _layer_merge_kernel,
        out_shape=jax.ShapeDtypeStruct((rows, cols), dtype),
        grid_spec=pltpu.PrefetchScalarGridSpec(
            num_scalar_prefetch=0,
            grid=grid,
            in_specs=[
                pl.BlockSpec(memory_space=pltpu.MemorySpace.SMEM),  # [alpha, beta]
                pl.BlockSpec((tr, cols), lambda i: (i, 0)),         # pre block
                pl.BlockSpec((tr, cols), lambda i: (i, 0)),         # post block
            ],
            out_specs=pl.BlockSpec((tr, cols), lambda i: (i, 0)),
        ),
        compiler_params=pltpu.CompilerParams(
            dimension_semantics=("parallel",),   # megacore-shardable on v7x
            vmem_limit_bytes=32 << 20,
        ),
    )(ab, pre2d, post2d)

    out_flat = out2d.reshape(-1)
    if padded:
        out_flat = out_flat[:n]
    return out_flat.reshape(orig_shape)


if __name__ == "__main__":
    key = jax.random.PRNGKey(0)
    k1, k2, k3, k4 = jax.random.split(key, 4)

    # Small NCHW inputs, consistent with the module's usage.
    B, C, H, W = 2, 4, 16, 16
    pre = jax.random.normal(k1, (B, C, H, W), dtype=jnp.float32)
    post = jax.random.normal(k2, (B, C, H, W), dtype=jnp.float32)

    # Parameter init matching nn.Parameter(torch.zeros(1).squeeze()).
    layer_scale = jnp.zeros((), dtype=jnp.float32)

    # alpha = 0 -> output == post
    out = jax.block_until_ready(layer_merge(pre, post, layer_scale))
    assert out.shape == post.shape
    assert jnp.allclose(out, post, atol=1e-6), "mismatch vs reference (alpha=0)"

    # Non-trivial alpha.
    out2 = jax.block_until_ready(layer_merge(pre, post, jnp.float32(0.3)))
    ref2 = pre * 0.3 + 0.7 * post
    assert jnp.allclose(out2, ref2, atol=1e-6), "mismatch vs reference (alpha=0.3)"

    # Clamp path: alpha=5 clamps to 1 -> output == pre.
    out3 = jax.block_until_ready(layer_merge(pre, post, jnp.float32(5.0)))
    assert jnp.allclose(out3, pre, atol=1e-6), "mismatch vs reference (clamp)"

    # Pad/slice fallback path (element count not a multiple of 128).
    p4 = jax.random.normal(k3, (3, 5, 7, 11), dtype=jnp.float32)
    q4 = jax.random.normal(k4, (3, 5, 7, 11), dtype=jnp.float32)
    out4 = jax.block_until_ready(layer_merge(p4, q4, jnp.float32(0.25)))
    ref4 = p4 * 0.25 + 0.75 * q4
    assert jnp.allclose(out4, ref4, atol=1e-6), "mismatch vs reference (odd shape)"

    # bf16 path (compute stays in bf16; loose tolerance vs f32 reference).
    pre_bf = pre.astype(jnp.bfloat16)
    post_bf = post.astype(jnp.bfloat16)
    out5 = jax.block_until_ready(layer_merge(pre_bf, post_bf, jnp.float32(0.3)))
    ref5 = pre_bf.astype(jnp.float32) * 0.3 + 0.7 * post_bf.astype(jnp.float32)
    assert jnp.allclose(out5.astype(jnp.float32), ref5, atol=2e-2), "mismatch (bf16)"

    print("KERNEL_OK")
</pallas_src>

<mosaic_0001>
module attributes {stable_mosaic.version = 11 : i64} {
  func.func @_layer_merge_kernel(%arg0: i32, %arg1: memref<2xf32, #tpu.memory_space<smem>>, %arg2: memref<2x1024xf32, #tpu.memory_space<vmem>>, %arg3: memref<2x1024xf32, #tpu.memory_space<vmem>>, %arg4: memref<2x1024xf32, #tpu.memory_space<vmem>>) attributes {dimension_semantics = [#tpu.dimension_semantics<parallel>], iteration_bounds = array<i64: 1>, scalar_prefetch = 0 : i64, scratch_operands = 0 : i64, tpu.core_type = #tpu.core_type<tc>, window_params = [{transform_indices = @transform_0, window_bounds = array<i64: 2>}, {transform_indices = @transform_1, window_bounds = array<i64: 2, 1024>}, {transform_indices = @transform_2, window_bounds = array<i64: 2, 1024>}, {transform_indices = @transform_3, window_bounds = array<i64: 2, 1024>}]} {
    %c0 = arith.constant 0 : index
    %0 = memref.load %arg1[%c0] : memref<2xf32, #tpu.memory_space<smem>>
    %c1 = arith.constant 1 : index
    %1 = memref.load %arg1[%c1] : memref<2xf32, #tpu.memory_space<smem>>
    %c0_0 = arith.constant 0 : index
    %c0_1 = arith.constant 0 : index
    %2 = vector.load %arg2[%c0_0, %c0_1] : memref<2x1024xf32, #tpu.memory_space<vmem>>, vector<2x1024xf32>
    %3 = vector.broadcast %0 : f32 to vector<2x1024xf32>
    %4 = arith.mulf %2, %3 : vector<2x1024xf32>
    %c0_2 = arith.constant 0 : index
    %c0_3 = arith.constant 0 : index
    %5 = vector.load %arg3[%c0_2, %c0_3] : memref<2x1024xf32, #tpu.memory_space<vmem>>, vector<2x1024xf32>
    %6 = vector.broadcast %1 : f32 to vector<2x1024xf32>
    %7 = arith.mulf %5, %6 : vector<2x1024xf32>
    %8 = arith.addf %4, %7 : vector<2x1024xf32>
    %c0_4 = arith.constant 0 : index
    %c0_5 = arith.constant 0 : index
    %9 = vector.load %arg4[%c0_4, %c0_5] : memref<2x1024xf32, #tpu.memory_space<vmem>>, vector<2x1024xf32>
    tpu.vector_store %arg4[%c0_4, %c0_5], %8 {strides = array<i32>} : memref<2x1024xf32, #tpu.memory_space<vmem>>, vector<2x1024xf32>,
    return
  }
  func.func @transform_0(%arg0: i32) -> i32 {
    %c0_i32 = arith.constant 0 : i32
    %c0_i32_0 = arith.constant 0 : i32
    return %c0_i32 : i32
  }
  func.func @transform_1(%arg0: i32) -> (i32, i32) {
    %c0_i32 = arith.constant 0 : i32
    %c0_i32_0 = arith.constant 0 : i32
    return %arg0, %c0_i32 : i32, i32
  }
  func.func @transform_2(%arg0: i32) -> (i32, i32) {
    %c0_i32 = arith.constant 0 : i32
    %c0_i32_0 = arith.constant 0 : i32
    return %arg0, %c0_i32 : i32, i32
  }
  func.func @transform_3(%arg0: i32) -> (i32, i32) {
    %c0_i32 = arith.constant 0 : i32
    %c0_i32_0 = arith.constant 0 : i32
    return %arg0, %c0_i32 : i32, i32
  }
}

</mosaic_0001>

<llo_original>
// kernel: tpu_custom_call.1
$region0: #{tpu_custom_call.1}
  #allocation0 [shape = 'u32[]', space=smem, size = 0x4, offset = 0x4, fixed_abs, tag = 'smem constant byte address 0x4 - core index']
  #allocation1 [shape = 'u32[144,128]{1,0:T(1,128)}', space=vmem, size = 0x12000, scoped, tag = 'internal scratch']
  %s0 = inlined_call_operand.hbm [shape: f32[2], index: 0, kind: input, shape index: {}]
  %s1 = inlined_call_operand.hbm [shape: f32[2,1024], index: 1, kind: input, shape index: {}]
  %s2 = inlined_call_operand.hbm [shape: f32[2,1024], index: 2, kind: input, shape index: {}]
  %s3 = inlined_call_operand.hbm [shape: f32[2,1024], index: 3, kind: output, shape index: {}]
  %s4 = sld [smem:[#allocation0]]
  $region34: #{tpu_custom_call.1} parent=0
    _
  %s6 = ssub.s32 1, %s4
  %s7 = scalar_select 0, %s6, %s4
  $region1: #{tpu_custom_call.1} parent=0
    #allocation2 [shape = 'u8[512]{0}', space=smem, size = 0x200, scoped, tag = 'input window, operand 0, single buffered']
    #allocation3 [shape = 's32[1]{0}', space=sflag, size = 0x4, scoped, tag = 'scoped memory for tpu_custom_call.1']
    #allocation4 [shape = 's32[1]{0}', space=sflag, size = 0x4, scoped, tag = 'scoped memory for tpu_custom_call.1']
    #allocation5 [shape = 's32[1]{0}', space=sflag, size = 0x4, scoped, tag = 'scoped memory for tpu_custom_call.1']
    #allocation6 [shape = 'u8[8192]{0}', space=vmem, size = 0x2000, scoped, tag = 'input window, operand 1, single buffered']
    #allocation7 [shape = 'u8[8192]{0}', space=vmem, size = 0x2000, scoped, tag = 'input window, operand 2, single buffered']
    #allocation8 [shape = 's32[1]{0}', space=sflag, size = 0x4, scoped, tag = 'scoped memory for tpu_custom_call.1']
    #allocation9 [shape = 'u8[8192]{0}', space=vmem, size = 0x2000, scoped, tag = 'output window, operand 0, single buffered']
    %8 = vsyncpa [#allocation5], 0
    %9 = vsyncpa [#allocation3], 0
    %10 = vsyncpa [#allocation8], 0
    %11 = vsyncpa [#allocation4], 0
    // Predicated region
    $region2: #{tpu_custom_call.1} parent=1 // pred_check
      _
    $region3: #{tpu_custom_call.1} parent=1 // pred_check_branch
      %13 = sbr.rel (0) target = $region5
    $region4: #{tpu_custom_call.1} parent=1 // pred_region
      %s15 = ssub.s32 16, 16
      %16 = vsyncadd [#allocation5], %s15
      %19 = dma.hbm_to_smem %s0, 16, [#allocation2], [#allocation5]
    $region5: #{tpu_custom_call.1} parent=1 // pred_fallthru
      _
    // Predicated region
    $region6: #{tpu_custom_call.1} parent=1 // pred_check
      _
    $region7: #{tpu_custom_call.1} parent=1 // pred_check_branch
      %21 = sbr.rel (0) target = $region9
    $region8: #{tpu_custom_call.1} parent=1 // pred_region
      %s23 = ssub.s32 256, 256
      %24 = vsyncadd [#allocation3], %s23
      %s26 = sshll.u32 [#allocation6], 4
      %s27 = int_to_ptr.vmem [resolvable:$true] %s26
      %29 = dma.hbm_to_vmem [thread:$0]  %s1, 256, %s27, [#allocation3]
    $region9: #{tpu_custom_call.1} parent=1 // pred_fallthru
      _
    // Predicated region
    $region10: #{tpu_custom_call.1} parent=1 // pred_check
      _
    $region11: #{tpu_custom_call.1} parent=1 // pred_check_branch
      %31 = sbr.rel (0) target = $region13
    $region12: #{tpu_custom_call.1} parent=1 // pred_region
      %s33 = ssub.s32 256, 256
      %34 = vsyncadd [#allocation8], %s33
      %s36 = sshll.u32 [#allocation7], 4
      %s37 = int_to_ptr.vmem [resolvable:$true] %s36
      %39 = dma.hbm_to_vmem [thread:$0]  %s2, 256, %s37, [#allocation8]
    $region13: #{tpu_custom_call.1} parent=1 // pred_fallthru
      _
    // Predicated region
    $region14: #{tpu_custom_call.1} parent=1 // pred_check
      _
    $region15: #{tpu_custom_call.1} parent=1 // pred_check_branch
      %41 = sbr.rel (0) target = $region17
    $region16: #{tpu_custom_call.1} parent=1 // pred_region
      %42 = dma.done [#allocation5], 16
    $region17: #{tpu_custom_call.1} parent=1 // pred_fallthru
      _
    // Predicated region
    $region18: #{tpu_custom_call.1} parent=1 // pred_check
      _
    $region19: #{tpu_custom_call.1} parent=1 // pred_check_branch
      %44 = sbr.rel (0) target = $region21
    $region20: #{tpu_custom_call.1} parent=1 // pred_region
      %45 = dma.done [#allocation3], 256
    $region21: #{tpu_custom_call.1} parent=1 // pred_fallthru
      _
    // Predicated region
    $region22: #{tpu_custom_call.1} parent=1 // pred_check
      _
    $region23: #{tpu_custom_call.1} parent=1 // pred_check_branch
      %47 = sbr.rel (0) target = $region25
    $region24: #{tpu_custom_call.1} parent=1 // pred_region
      %48 = dma.done [#allocation8], 256
    $region25: #{tpu_custom_call.1} parent=1 // pred_fallthru
      _
    %49 = sfence
    %s50 = sld [smem:[#allocation2]]
    %s51 = sld [smem:[#allocation2 + $0x1]]
    %v52 = vld [vmem:[#allocation6] sm:$0xff]
    %v53 = vld [vmem:[#allocation6 + $0x8] sm:$0xff]
    %v54 = vstv %s50
    %v55 = vmul.f32 %v52, %v54
    %v56 = vmul.f32 %v53, %v54
    %v57 = vld [vmem:[#allocation7] sm:$0xff]
    %v58 = vld [vmem:[#allocation7 + $0x8] sm:$0xff]
    %v59 = vstv %s51
    %v60 = vmul.f32 %v57, %v59
    %v61 = vmul.f32 %v58, %v59
    %v62 = vadd.f32 %v55, %v60
    %v63 = vadd.f32 %v56, %v61
    %64 = vst [vmem:[#allocation9] sm:$0xff] %v62
    %65 = vst [vmem:[#allocation9 + $0x8] sm:$0xff] %v63
    // Predicated region
    $region26: #{tpu_custom_call.1} parent=1 // pred_check
      _
    $region27: #{tpu_custom_call.1} parent=1 // pred_check_branch
      %67 = sbr.rel (0) target = $region29
    $region28: #{tpu_custom_call.1} parent=1 // pred_region
      %s69 = ssub.s32 256, 256
      %70 = vsyncadd [#allocation4], %s69
      %s72 = sshll.u32 [#allocation9], 4
      %s73 = int_to_ptr.vmem [resolvable:$true] %s72
      %75 = dma.vmem_to_hbm [thread:$0]  %s73, 256, %s3, [#allocation4]
    $region29: #{tpu_custom_call.1} parent=1 // pred_fallthru
      _
    // Predicated region
    $region30: #{tpu_custom_call.1} parent=1 // pred_check
      _
    $region31: #{tpu_custom_call.1} parent=1 // pred_check_branch
      %77 = sbr.rel (0) target = $region33
    $region32: #{tpu_custom_call.1} parent=1 // pred_region
      %78 = dma.done [#allocation4], 256
    $region33: #{tpu_custom_call.1} parent=1 // pred_fallthru
      _
    %79 = vsyncpa [#allocation3], 1
    %80 = vsyncpa [#allocation8], 1
    %81 = vsyncpa [#allocation4], 1
    %82 = vsyncpa [#allocation5], 1

</llo_original>
